<compile_context>
chip_gen: v7x
topology: tpu7x:2x2x1
jax: 0.10.0
libtpu: 0.0.40
codegen_flags: <defaults>
</compile_context>

<pallas_src>
import numpy as np
import jax
import jax.numpy as jnp
from jax import lax
from jax.experimental import pallas as pl
from jax.experimental.pallas import tpu as pltpu

# ----------------------------- module hyper-params (synthetic) --------------
MIN_WIDTH = 8      # min_width
ENC_FEAT = 8       # encoder_features (== C)
ATT_FC = 32        # att_fc_size
HIDDEN = 32        # hidden_size
CONV_CH = 16       # conv_block out channels
KSIZE = 15         # conv kernel size
PAD = 7            # conv padding
EPS = 1e-5         # InstanceNorm eps (PyTorch default)
MAX_TB = 64        # max batch tile per grid step


# ----------------------------- Pallas kernel --------------------------------
def vertical_attention_kernel(feat_ref, cat_ref, hidp_ref, P_ref,
                              ctx_ref, attn_ref):
    TB, H, CW = feat_ref.shape
    F = ATT_FC
    n_conv = 2 * KSIZE

    # ---- packed parameters (single VMEM block) ------------------------------
    P = P_ref[...]                                      # (CW + 2K + 2, F) f32
    A_enc = P[:CW, :]                                   # fused pool*width*enc
    W_ccb = P[CW:CW + n_conv, :]                        # fused conv*dense_conv
    b_sum = P[CW + n_conv:CW + n_conv + 1, :]           # all pre-tanh biases
    w_al = P[CW + n_conv + 1:CW + n_conv + 2, :]        # dense_align weight row

    feats = feat_ref[...].astype(jnp.float32)           # (TB, H, CW), upcast once

    # ---- dense_enc(dense_width(ada_pool(features))) as one matmul -----------
    enc = jnp.dot(feats.reshape(TB * H, CW), A_enc,
                  preferred_element_type=jnp.float32)   # (TB*H, F)

    # ---- InstanceNorm1d(2) over H (biased var, eps=1e-5) ---------------------
    # coverage clamp already applied in the wrapper.
    cat = cat_ref[...].astype(jnp.float32)              # (TB, H, 2)
    mean = jnp.mean(cat, axis=1, keepdims=True)
    var = jnp.mean((cat - mean) ** 2, axis=1, keepdims=True)
    catn = (cat - mean) / jnp.sqrt(var + EPS)

    # ---- Conv1d + dense_conv_block fused: im2col + one matmul ----------------
    zpad = jnp.zeros((TB, PAD, 2), jnp.float32)
    catp = jnp.concatenate([zpad, catn, zpad], axis=1)  # (TB, H + 2*PAD, 2)
    cols = [catp[:, k:k + H, :] for k in range(KSIZE)]  # KSIZE x (TB, H, 2)
    im2col = jnp.concatenate(cols, axis=2)              # (TB, H, 2*KSIZE)
    cat_proj = jnp.dot(im2col.reshape(TB * H, n_conv), W_ccb,
                       preferred_element_type=jnp.float32)   # (TB*H, F)

    # ---- sum of projections (+ folded biases), tanh --------------------------
    hidp = hidp_ref[...].astype(jnp.float32)            # (TB, F)  (dense_hidden, hoisted)
    s = (enc.reshape(TB, H, F) + cat_proj.reshape(TB, H, F)
         + hidp[:, None, :] + b_sum)                    # (TB, H, F)
    s = jnp.tanh(s)

    # ---- align score + softmax over H ----------------------------------------
    # dense_align bias dropped (softmax-invariant).
    align = jnp.sum(s * w_al, axis=-1, keepdims=True)   # (TB, H, 1)
    m = jnp.max(align, axis=1, keepdims=True)
    e = jnp.exp(align - m)
    attn = e / jnp.sum(e, axis=1, keepdims=True)        # (TB, H, 1)

    attn_t = jnp.swapaxes(attn, 1, 2)                   # (TB, 1, H)
    attn_ref[...] = attn_t[:, 0, :].astype(attn_ref.dtype)   # lane-dense (TB, H)

    # ---- context: attn^T @ features per sample on the MXU --------------------
    ctx = jnp.einsum("bqh,bhd->bqd", attn_t, feats,
                     preferred_element_type=jnp.float32)      # (TB, 1, CW)
    ctx_ref[...] = ctx[:, 0, :].astype(ctx_ref.dtype)         # lane-dense (TB, CW)


# ----------------------------- wrapper ---------------------------------------
def _batch_tiling(B):
    if B <= MAX_TB:
        return B, B
    TB = MAX_TB
    Bp = ((B + TB - 1) // TB) * TB
    return TB, Bp


def vertical_attention_forward(features, prev_attn, coverage, h0, p):
    """features (B,C,H,W) f32, prev_attn (B,H), coverage (B,H), h0 (1,B,HIDDEN)."""
    B, C, H, W = features.shape
    CW = C * W
    F = ATT_FC

    # lane-dense feature layout (B, H, C*W); bf16 halves HBM traffic.
    feats_r = jnp.transpose(features, (0, 2, 1, 3)).reshape(B, H, CW)
    feats_r = feats_r.astype(jnp.bfloat16)
    # coverage clamp hoisted out of the kernel
    catT = jnp.stack([prev_attn, jnp.clip(coverage, 0.0, 1.0)],
                     axis=-1).astype(jnp.float32)              # (B, H, 2)
    # dense_hidden hoisted (its bias is folded into the packed b_sum row)
    hidp = jnp.dot(h0[0], p["W_hid"]).astype(jnp.float32)       # (B, F)

    TB, Bp = _batch_tiling(B)
    if Bp != B:
        pad = Bp - B
        feats_r = jnp.pad(feats_r, ((0, pad), (0, 0), (0, 0)))
        catT = jnp.pad(catT, ((0, pad), (0, 0), (0, 0)))
        hidp = jnp.pad(hidp, ((0, pad), (0, 0)))

    P = p["packed"]
    n_rows = P.shape[0]
    grid = (Bp // TB,)

    in_specs = [
        pl.BlockSpec((TB, H, CW), lambda i: (i, 0, 0)),
        pl.BlockSpec((TB, H, 2), lambda i: (i, 0, 0)),
        pl.BlockSpec((TB, F), lambda i: (i, 0)),
        pl.BlockSpec((n_rows, F), lambda i: (0, 0)),
    ]
    out_specs = [
        pl.BlockSpec((TB, CW), lambda i: (i, 0)),
        pl.BlockSpec((TB, H), lambda i: (i, 0)),
    ]
    out_shape = (
        jax.ShapeDtypeStruct((Bp, CW), jnp.float32),
        jax.ShapeDtypeStruct((Bp, H), jnp.float32),
    )

    ctx_flat, attn = pl.pallas_call(
        vertical_attention_kernel,
        out_shape=out_shape,
        grid_spec=pltpu.PrefetchScalarGridSpec(
            num_scalar_prefetch=0,
            grid=grid,
            in_specs=in_specs,
            out_specs=out_specs,
        ),
        compiler_params=pltpu.CompilerParams(
            dimension_semantics=("parallel",)),
    )(feats_r, catT, hidp, P)

    ctx = ctx_flat[:B].reshape(B, C, W).astype(features.dtype)
    attn = attn[:B].astype(features.dtype)
    return ctx, attn, None   # (context_vector, attn_weights, decision)


# ----------------------------- pure-JAX reference ----------------------------
def reference_forward(features, prev_attn, coverage, h0, p):
    pooled = jnp.einsum("bchw,wm->bchm", features, p["poolM"])
    hfeat = jnp.einsum("bchm,m->bch", pooled, p["w_width"][0]) + p["b_width"][0, 0]
    enc = jnp.einsum("bch,cf->bhf", hfeat, p["W_enc"]) + p["b_enc"]
    cat = jnp.stack([prev_attn, jnp.clip(coverage, 0.0, 1.0)], axis=1)  # (B,2,H)
    mean = jnp.mean(cat, axis=2, keepdims=True)
    var = jnp.mean((cat - mean) ** 2, axis=2, keepdims=True)
    catn = (cat - mean) / jnp.sqrt(var + EPS)
    conv = lax.conv_general_dilated(catn, p["conv_w"], window_strides=(1,),
                                    padding=[(PAD, PAD)],
                                    dimension_numbers=("NCH", "OIH", "NCH"))
    conv = conv + p["conv_b"][None, :, None]
    cat_proj = jnp.einsum("boh,of->bhf", conv, p["W_cb"]) + p["b_cb"]
    hid_proj = (jnp.einsum("lbh,hf->lbf", h0, p["W_hid"]) + p["b_hid"]).transpose(1, 0, 2)
    s = jnp.tanh(enc + cat_proj + hid_proj)
    align = jnp.einsum("bhf,fk->bhk", s, p["W_align"]) + p["b_align"]
    attn = jax.nn.softmax(align, axis=1)
    ctx = jnp.einsum("bchw,bh->bcw", features, attn[..., 0])
    return ctx, attn[..., 0]


# ----------------------------- setup ------------------------------------------
def adaptive_pool_matrix(w, mw):
    """Exact nn.AdaptiveAvgPool2d((None, mw)) over the width dim as a matrix."""
    P = np.zeros((w, mw), np.float32)
    for j in range(mw):
        start = (j * w) // mw
        end = -(-((j + 1) * w) // mw)   # ceil
        P[start:end, j] = 1.0 / (end - start)
    return jnp.asarray(P)


def pack_params(p, W):
    """Fold the module's small linear layers into one VMEM parameter block.

    rows [0, C*W)        : A_enc[(c*W+w), f] = v[w] * W_enc[c, f],  v = poolM @ w_width
    rows [C*W, C*W+2K)   : W_ccb[(2k+c), f]  = sum_o conv_w[o,c,k] * W_cb[o, f]
    row  C*W+2K          : b_sum  (all pre-tanh biases folded together)
    row  C*W+2K+1        : dense_align weight (b_align dropped: softmax-invariant)
    """
    C = ENC_FEAT
    v = p["poolM"] @ p["w_width"][0]                                       # (W,)
    A_enc = (p["W_enc"][:, None, :] * v[None, :, None]).reshape(C * W, ATT_FC)
    W_ccb = jnp.einsum("ock,of->kcf", p["conv_w"], p["W_cb"]).reshape(2 * KSIZE, ATT_FC)
    b_sum = (p["b_enc"][0]
             + p["b_width"][0, 0] * jnp.sum(p["W_enc"], axis=0)
             + p["conv_b"] @ p["W_cb"]
             + p["b_cb"][0]
             + p["b_hid"][0]).reshape(1, ATT_FC)
    w_al = p["W_align"][:, 0].reshape(1, ATT_FC)
    return jnp.concatenate([A_enc, W_ccb, b_sum, w_al], axis=0).astype(jnp.float32)


def make_params(key, W):
    ks = jax.random.split(key, 12)

    def init(k, shape, scale=0.2):
        return jax.random.normal(k, shape, jnp.float32) * scale

    conv_w = init(ks[4], (CONV_CH, 2, KSIZE))          # PyTorch (out, in, k)
    conv_b = init(ks[5], (CONV_CH,))
    p = {
        "poolM": adaptive_pool_matrix(W, MIN_WIDTH),
        "w_width": init(ks[0], (1, MIN_WIDTH)),
        "b_width": init(ks[1], (1, 1)),
        "W_enc": init(ks[2], (ENC_FEAT, ATT_FC)),
        "b_enc": init(ks[3], (1, ATT_FC)),
        "conv_w": conv_w,
        "conv_b": conv_b,
        "W_cb": init(ks[6], (CONV_CH, ATT_FC)),
        "b_cb": init(ks[7], (1, ATT_FC)),
        "W_hid": init(ks[8], (HIDDEN, ATT_FC)),
        "b_hid": init(ks[9], (1, ATT_FC)),
        "W_align": init(ks[10], (ATT_FC, 1)),
        "b_align": init(ks[11], (1, 1)),
    }
    p["packed"] = pack_params(p, W)
    return p


if __name__ == "__main__":
    B, C, H, W = 2, ENC_FEAT, 16, 32

    key = jax.random.PRNGKey(0)
    kx = jax.random.split(key, 5)
    features = jax.random.normal(kx[0], (B, C, H, W), jnp.float32)
    prev_attn = jax.nn.softmax(jax.random.normal(kx[1], (B, H), jnp.float32), axis=1)
    coverage = jax.random.normal(kx[2], (B, H), jnp.float32) * 0.7 + 0.4
    h0 = jax.random.normal(kx[3], (1, B, HIDDEN), jnp.float32)   # hidden[0]
    params = make_params(kx[4], W)

    ctx, attn, decision = vertical_attention_forward(features, prev_attn,
                                                     coverage, h0, params)
    jax.block_until_ready((ctx, attn))

    # reference consumes the same bf16-rounded features the kernel reads from HBM
    features_q = features.astype(jnp.bfloat16).astype(jnp.float32)
    ctx_ref, attn_ref_v = reference_forward(features_q, prev_attn, coverage, h0, params)
    assert ctx.shape == (B, C, W) and attn.shape == (B, H)
    np.testing.assert_allclose(np.asarray(ctx), np.asarray(ctx_ref),
                               rtol=2e-3, atol=2e-3)
    np.testing.assert_allclose(np.asarray(attn), np.asarray(attn_ref_v),
                               rtol=2e-3, atol=2e-3)
    print("KERNEL_OK")
</pallas_src>

<mosaic_0001>
module attributes {stable_mosaic.version = 11 : i64} {
  func.func @vertical_attention_kernel(%arg0: i32, %arg1: memref<2x16x256xbf16, #tpu.memory_space<vmem>>, %arg2: memref<2x16x2xf32, #tpu.memory_space<vmem>>, %arg3: memref<2x32xf32, #tpu.memory_space<vmem>>, %arg4: memref<288x32xf32, #tpu.memory_space<vmem>>, %arg5: memref<2x256xf32, #tpu.memory_space<vmem>>, %arg6: memref<2x16xf32, #tpu.memory_space<vmem>>) attributes {dimension_semantics = [#tpu.dimension_semantics<parallel>], iteration_bounds = array<i64: 1>, scalar_prefetch = 0 : i64, scratch_operands = 0 : i64, tpu.core_type = #tpu.core_type<tc>, window_params = [{transform_indices = @transform_0, window_bounds = array<i64: 2, 16, 256>}, {transform_indices = @transform_1, window_bounds = array<i64: 2, 16, 2>}, {transform_indices = @transform_2, window_bounds = array<i64: 2, 32>}, {pipeline_mode = #tpu.pipeline_mode<synchronous>, transform_indices = @transform_3, window_bounds = array<i64: 288, 32>}, {transform_indices = @transform_4, window_bounds = array<i64: 2, 256>}, {transform_indices = @transform_5, window_bounds = array<i64: 2, 16>}]} {
    %c0 = arith.constant 0 : index
    %c0_0 = arith.constant 0 : index
    %0 = vector.load %arg4[%c0, %c0_0] : memref<288x32xf32, #tpu.memory_space<vmem>>, vector<288x32xf32>
    %1 = vector.extract_strided_slice %0 {offsets = [0, 0], sizes = [256, 32], strides = [1, 1]} : vector<288x32xf32> to vector<256x32xf32>
    %2 = vector.extract_strided_slice %0 {offsets = [256, 0], sizes = [30, 32], strides = [1, 1]} : vector<288x32xf32> to vector<30x32xf32>
    %3 = vector.extract_strided_slice %0 {offsets = [286, 0], sizes = [1, 32], strides = [1, 1]} : vector<288x32xf32> to vector<1x32xf32>
    %4 = vector.extract_strided_slice %0 {offsets = [287, 0], sizes = [1, 32], strides = [1, 1]} : vector<288x32xf32> to vector<1x32xf32>
    %c0_1 = arith.constant 0 : index
    %c0_2 = arith.constant 0 : index
    %c0_3 = arith.constant 0 : index
    %5 = vector.load %arg1[%c0_1, %c0_2, %c0_3] : memref<2x16x256xbf16, #tpu.memory_space<vmem>>, vector<2x16x256xbf16>
    %6 = arith.extf %5 : vector<2x16x256xbf16> to vector<2x16x256xf32>
    %7 = vector.shape_cast %6 : vector<2x16x256xf32> to vector<32x256xf32>
    %cst = arith.constant dense<0.000000e+00> : vector<32x32xf32>
    %8 = tpu.matmul %7, %1, %cst {dimension_numbers = #tpu.dot_dimension_numbers<[1], [0], [0], [1], [0, 0, 1, 1], [], []>} : vector<32x256xf32>, vector<256x32xf32>, vector<32x32xf32> -> vector<32x32xf32>
    %c0_4 = arith.constant 0 : index
    %c0_5 = arith.constant 0 : index
    %c0_6 = arith.constant 0 : index
    %9 = vector.load %arg2[%c0_4, %c0_5, %c0_6] : memref<2x16x2xf32, #tpu.memory_space<vmem>>, vector<2x16x2xf32>
    %cst_7 = arith.constant dense<0.000000e+00> : vector<2x2xf32>
    %10 = vector.multi_reduction <add>, %9, %cst_7 [1] : vector<2x16x2xf32> to vector<2x2xf32>
    %11 = vector.shape_cast %10 : vector<2x2xf32> to vector<2x1x2xf32>
    %cst_8 = arith.constant 1.600000e+01 : f32
    %12 = vector.broadcast %cst_8 : f32 to vector<2x1x2xf32>
    %13 = arith.divf %11, %12 : vector<2x1x2xf32>
    %14 = vector.broadcast %13 : vector<2x1x2xf32> to vector<2x16x2xf32>
    %15 = arith.subf %9, %14 : vector<2x16x2xf32>
    %16 = arith.mulf %15, %15 : vector<2x16x2xf32>
    %cst_9 = arith.constant dense<0.000000e+00> : vector<2x2xf32>
    %17 = vector.multi_reduction <add>, %16, %cst_9 [1] : vector<2x16x2xf32> to vector<2x2xf32>
    %18 = vector.shape_cast %17 : vector<2x2xf32> to vector<2x1x2xf32>
    %cst_10 = arith.constant 1.600000e+01 : f32
    %19 = vector.broadcast %cst_10 : f32 to vector<2x1x2xf32>
    %20 = arith.divf %18, %19 : vector<2x1x2xf32>
    %21 = vector.broadcast %13 : vector<2x1x2xf32> to vector<2x16x2xf32>
    %22 = arith.subf %9, %21 : vector<2x16x2xf32>
    %cst_11 = arith.constant 9.99999974E-6 : f32
    %23 = vector.broadcast %cst_11 : f32 to vector<2x1x2xf32>
    %24 = arith.addf %20, %23 : vector<2x1x2xf32>
    %25 = math.sqrt %24 : vector<2x1x2xf32>
    %26 = vector.broadcast %25 : vector<2x1x2xf32> to vector<2x16x2xf32>
    %27 = arith.divf %22, %26 : vector<2x16x2xf32>
    %cst_12 = arith.constant 0.000000e+00 : f32
    %28 = vector.broadcast %cst_12 : f32 to vector<2x7x2xf32>
    %29 = tpu.concatenate %28, %27, %28 in 1 : vector<2x7x2xf32>, vector<2x16x2xf32>, vector<2x7x2xf32> -> vector<2x30x2xf32>
    %30 = vector.extract_strided_slice %29 {offsets = [0, 0, 0], sizes = [2, 16, 2], strides = [1, 1, 1]} : vector<2x30x2xf32> to vector<2x16x2xf32>
    %31 = vector.extract_strided_slice %29 {offsets = [0, 1, 0], sizes = [2, 16, 2], strides = [1, 1, 1]} : vector<2x30x2xf32> to vector<2x16x2xf32>
    %32 = vector.extract_strided_slice %29 {offsets = [0, 2, 0], sizes = [2, 16, 2], strides = [1, 1, 1]} : vector<2x30x2xf32> to vector<2x16x2xf32>
    %33 = vector.extract_strided_slice %29 {offsets = [0, 3, 0], sizes = [2, 16, 2], strides = [1, 1, 1]} : vector<2x30x2xf32> to vector<2x16x2xf32>
    %34 = vector.extract_strided_slice %29 {offsets = [0, 4, 0], sizes = [2, 16, 2], strides = [1, 1, 1]} : vector<2x30x2xf32> to vector<2x16x2xf32>
    %35 = vector.extract_strided_slice %29 {offsets = [0, 5, 0], sizes = [2, 16, 2], strides = [1, 1, 1]} : vector<2x30x2xf32> to vector<2x16x2xf32>
    %36 = vector.extract_strided_slice %29 {offsets = [0, 6, 0], sizes = [2, 16, 2], strides = [1, 1, 1]} : vector<2x30x2xf32> to vector<2x16x2xf32>
    %37 = vector.extract_strided_slice %29 {offsets = [0, 7, 0], sizes = [2, 16, 2], strides = [1, 1, 1]} : vector<2x30x2xf32> to vector<2x16x2xf32>
    %38 = vector.extract_strided_slice %29 {offsets = [0, 8, 0], sizes = [2, 16, 2], strides = [1, 1, 1]} : vector<2x30x2xf32> to vector<2x16x2xf32>
    %39 = vector.extract_strided_slice %29 {offsets = [0, 9, 0], sizes = [2, 16, 2], strides = [1, 1, 1]} : vector<2x30x2xf32> to vector<2x16x2xf32>
    %40 = vector.extract_strided_slice %29 {offsets = [0, 10, 0], sizes = [2, 16, 2], strides = [1, 1, 1]} : vector<2x30x2xf32> to vector<2x16x2xf32>
    %41 = vector.extract_strided_slice %29 {offsets = [0, 11, 0], sizes = [2, 16, 2], strides = [1, 1, 1]} : vector<2x30x2xf32> to vector<2x16x2xf32>
    %42 = vector.extract_strided_slice %29 {offsets = [0, 12, 0], sizes = [2, 16, 2], strides = [1, 1, 1]} : vector<2x30x2xf32> to vector<2x16x2xf32>
    %43 = vector.extract_strided_slice %29 {offsets = [0, 13, 0], sizes = [2, 16, 2], strides = [1, 1, 1]} : vector<2x30x2xf32> to vector<2x16x2xf32>
    %44 = vector.extract_strided_slice %29 {offsets = [0, 14, 0], sizes = [2, 16, 2], strides = [1, 1, 1]} : vector<2x30x2xf32> to vector<2x16x2xf32>
    %45 = tpu.concatenate %30, %31, %32, %33, %34, %35, %36, %37, %38, %39, %40, %41, %42, %43, %44 in 2 : vector<2x16x2xf32>, vector<2x16x2xf32>, vector<2x16x2xf32>, vector<2x16x2xf32>, vector<2x16x2xf32>, vector<2x16x2xf32>, vector<2x16x2xf32>, vector<2x16x2xf32>, vector<2x16x2xf32>, vector<2x16x2xf32>, vector<2x16x2xf32>, vector<2x16x2xf32>, vector<2x16x2xf32>, vector<2x16x2xf32>, vector<2x16x2xf32> -> vector<2x16x30xf32>
    %46 = vector.shape_cast %45 : vector<2x16x30xf32> to vector<32x30xf32>
    %cst_13 = arith.constant dense<0.000000e+00> : vector<32x32xf32>
    %47 = tpu.matmul %46, %2, %cst_13 {dimension_numbers = #tpu.dot_dimension_numbers<[1], [0], [0], [1], [0, 0, 1, 1], [], []>} : vector<32x30xf32>, vector<30x32xf32>, vector<32x32xf32> -> vector<32x32xf32>
    %c0_14 = arith.constant 0 : index
    %c0_15 = arith.constant 0 : index
    %48 = vector.load %arg3[%c0_14, %c0_15] : memref<2x32xf32, #tpu.memory_space<vmem>>, vector<2x32xf32>
    %49 = vector.shape_cast %8 : vector<32x32xf32> to vector<2x16x32xf32>
    %50 = vector.shape_cast %47 : vector<32x32xf32> to vector<2x16x32xf32>
    %51 = arith.addf %49, %50 : vector<2x16x32xf32>
    %52 = vector.shape_cast %48 : vector<2x32xf32> to vector<2x1x32xf32>
    %53 = vector.broadcast %52 : vector<2x1x32xf32> to vector<2x16x32xf32>
    %54 = arith.addf %51, %53 : vector<2x16x32xf32>
    %55 = vector.shape_cast %3 : vector<1x32xf32> to vector<1x1x32xf32>
    %56 = vector.broadcast %55 : vector<1x1x32xf32> to vector<2x16x32xf32>
    %57 = arith.addf %54, %56 : vector<2x16x32xf32>
    %58 = math.tanh %57 : vector<2x16x32xf32>
    %59 = vector.shape_cast %4 : vector<1x32xf32> to vector<1x1x32xf32>
    %60 = vector.broadcast %59 : vector<1x1x32xf32> to vector<2x16x32xf32>
    %61 = arith.mulf %58, %60 : vector<2x16x32xf32>
    %cst_16 = arith.constant dense<0.000000e+00> : vector<2x16xf32>
    %62 = vector.multi_reduction <add>, %61, %cst_16 [2] : vector<2x16x32xf32> to vector<2x16xf32>
    %63 = vector.shape_cast %62 : vector<2x16xf32> to vector<2x16x1xf32>
    %cst_17 = arith.constant dense<0xFF800000> : vector<2x1xf32>
    %64 = vector.multi_reduction <maximumf>, %63, %cst_17 [1] : vector<2x16x1xf32> to vector<2x1xf32>
    %65 = vector.shape_cast %64 : vector<2x1xf32> to vector<2x1x1xf32>
    %66 = vector.broadcast %65 : vector<2x1x1xf32> to vector<2x16x1xf32>
    %67 = arith.subf %63, %66 : vector<2x16x1xf32>
    %68 = math.exp %67 : vector<2x16x1xf32>
    %cst_18 = arith.constant dense<0.000000e+00> : vector<2x1xf32>
    %69 = vector.multi_reduction <add>, %68, %cst_18 [1] : vector<2x16x1xf32> to vector<2x1xf32>
    %70 = vector.shape_cast %69 : vector<2x1xf32> to vector<2x1x1xf32>
    %71 = vector.broadcast %70 : vector<2x1x1xf32> to vector<2x16x1xf32>
    %72 = arith.divf %68, %71 : vector<2x16x1xf32>
    %73 = tpu.transpose %72, [0, 2, 1] : vector<2x16x1xf32> -> vector<2x1x16xf32>
    %74 = vector.shape_cast %73 : vector<2x1x16xf32> to vector<2x16xf32>
    %c0_19 = arith.constant 0 : index
    %c0_20 = arith.constant 0 : index
    %75 = vector.load %arg6[%c0_19, %c0_20] : memref<2x16xf32, #tpu.memory_space<vmem>>, vector<2x16xf32>
    tpu.vector_store %arg6[%c0_19, %c0_20], %74 {strides = array<i32>} : memref<2x16xf32, #tpu.memory_space<vmem>>, vector<2x16xf32>,
    "tpu.trace_start"() <{level = 10 : i32, message = "bqh,bhd->bqd"}> : () -> ()
    %cst_21 = arith.constant dense<0.000000e+00> : vector<2x1x256xf32>
    %76 = tpu.matmul %73, %6, %cst_21 {dimension_numbers = #tpu.dot_dimension_numbers<[2], [1], [1], [2], [0, 0, 0, 1, 1, 2], [0], [0]>} : vector<2x1x16xf32>, vector<2x16x256xf32>, vector<2x1x256xf32> -> vector<2x1x256xf32>
    "tpu.trace_stop"() : () -> ()
    %77 = vector.shape_cast %76 : vector<2x1x256xf32> to vector<2x256xf32>
    %c0_22 = arith.constant 0 : index
    %c0_23 = arith.constant 0 : index
    %78 = vector.load %arg5[%c0_22, %c0_23] : memref<2x256xf32, #tpu.memory_space<vmem>>, vector<2x256xf32>
    tpu.vector_store %arg5[%c0_22, %c0_23], %77 {strides = array<i32>} : memref<2x256xf32, #tpu.memory_space<vmem>>, vector<2x256xf32>,
    return
  }
  func.func @transform_0(%arg0: i32) -> (i32, i32, i32) {
    %c0_i32 = arith.constant 0 : i32
    %c0_i32_0 = arith.constant 0 : i32
    %c0_i32_1 = arith.constant 0 : i32
    return %arg0, %c0_i32, %c0_i32_0 : i32, i32, i32
  }
  func.func @transform_1(%arg0: i32) -> (i32, i32, i32) {
    %c0_i32 = arith.constant 0 : i32
    %c0_i32_0 = arith.constant 0 : i32
    %c0_i32_1 = arith.constant 0 : i32
    return %arg0, %c0_i32, %c0_i32_0 : i32, i32, i32
  }
  func.func @transform_2(%arg0: i32) -> (i32, i32) {
    %c0_i32 = arith.constant 0 : i32
    %c0_i32_0 = arith.constant 0 : i32
    return %arg0, %c0_i32 : i32, i32
  }
  func.func @transform_3(%arg0: i32) -> (i32, i32) {
    %c0_i32 = arith.constant 0 : i32
    %c0_i32_0 = arith.constant 0 : i32
    %c0_i32_1 = arith.constant 0 : i32
    return %c0_i32, %c0_i32_0 : i32, i32
  }
  func.func @transform_4(%arg0: i32) -> (i32, i32) {
    %c0_i32 = arith.constant 0 : i32
    %c0_i32_0 = arith.constant 0 : i32
    return %arg0, %c0_i32 : i32, i32
  }
  func.func @transform_5(%arg0: i32) -> (i32, i32) {
    %c0_i32 = arith.constant 0 : i32
    %c0_i32_0 = arith.constant 0 : i32
    return %arg0, %c0_i32 : i32, i32
  }
}

</mosaic_0001>

<llo_original>
// kernel: tpu_custom_call.1
$region0: #{tpu_custom_call.1}
  #allocation0 [shape = 'u32[]', space=smem, size = 0x4, offset = 0x4, fixed_abs, tag = 'smem constant byte address 0x4 - core index']
  #allocation1 [shape = 'u32[144,128]{1,0:T(1,128)}', space=vmem, size = 0x12000, scoped, tag = 'internal scratch']
  %s0 = inlined_call_operand.vmem [shape: bf16[2,16,256], index: 0, kind: input, shape index: {}]
  %s1 = inlined_call_operand.vmem [shape: f32[2,16,2], index: 1, kind: input, shape index: {}]
  %s2 = inlined_call_operand.vmem [shape: f32[2,32], index: 2, kind: input, shape index: {}]
  %s3 = inlined_call_operand.vmem [shape: f32[288,32], index: 3, kind: input, shape index: {}]
  %s4 = inlined_call_operand.hbm [shape: f32[2,256], index: 4, kind: output, shape index: {0}]
  %s5 = inlined_call_operand.hbm [shape: f32[2,16], index: 5, kind: output, shape index: {1}]
  %6 = xla_tuple %s4, %s5
  %s7 = sld [smem:[#allocation0]]
  $region34: #{tpu_custom_call.1} parent=0
    _
  %s9 = ssub.s32 1, %s7
  %s10 = scalar_select 0, %s9, %s7
  $region1: #{tpu_custom_call.1} parent=0
    #allocation2 [shape = 'u8[2048]{0}', space=vmem, size = 0x800, scoped, tag = 'output window, operand 0, single buffered']
    #allocation3 [shape = 's32[1]{0}', space=sflag, size = 0x4, scoped, tag = 'scoped memory for tpu_custom_call.1']
    #allocation4 [shape = 'u8[1024]{0}', space=vmem, size = 0x400, scoped, tag = 'output window, operand 1, single buffered']
    #allocation5 [shape = 's32[1]{0}', space=sflag, size = 0x4, scoped, tag = 'scoped memory for tpu_custom_call.1']
    %11 = vsyncpa [#allocation3], 0
    %12 = vsyncpa [#allocation5], 0
    // Predicated region
    $region2: #{tpu_custom_call.1} parent=1 // pred_check
      _
    $region3: #{tpu_custom_call.1} parent=1 // pred_check_branch
      %14 = sbr.rel (0) target = $region5
    $region4: #{tpu_custom_call.1} parent=1 // pred_region
      _
    $region5: #{tpu_custom_call.1} parent=1 // pred_fallthru
      _
    // Predicated region
    $region6: #{tpu_custom_call.1} parent=1 // pred_check
      _
    $region7: #{tpu_custom_call.1} parent=1 // pred_check_branch
      %16 = sbr.rel (0) target = $region9
    $region8: #{tpu_custom_call.1} parent=1 // pred_region
      _
    $region9: #{tpu_custom_call.1} parent=1 // pred_fallthru
      _
    // Predicated region
    $region10: #{tpu_custom_call.1} parent=1 // pred_check
      _
    $region11: #{tpu_custom_call.1} parent=1 // pred_check_branch
      %18 = sbr.rel (0) target = $region13
    $region12: #{tpu_custom_call.1} parent=1 // pred_region
      _
    $region13: #{tpu_custom_call.1} parent=1 // pred_fallthru
      _
    // Predicated region
    $region14: #{tpu_custom_call.1} parent=1 // pred_check
      _
    $region15: #{tpu_custom_call.1} parent=1 // pred_check_branch
      %20 = sbr.rel (0) target = $region17
    $region16: #{tpu_custom_call.1} parent=1 // pred_region
      _
    $region17: #{tpu_custom_call.1} parent=1 // pred_fallthru
      _
    %v21 = vld [vmem:[%s3] sm:$0xff]
    %v22 = vld [vmem:[%s3 + $0x8] sm:$0xff]
    %v23 = vld [vmem:[%s3 + $0x10] sm:$0xff]
    %v24 = vld [vmem:[%s3 + $0x18] sm:$0xff]
    %v25 = vld [vmem:[%s3 + $0x20] sm:$0xff]
    %v26 = vld [vmem:[%s3 + $0x28] sm:$0xff]
    %v27 = vld [vmem:[%s3 + $0x30] sm:$0xff]
    %v28 = vld [vmem:[%s3 + $0x38] sm:$0xff]
    %v29 = vld [vmem:[%s3 + $0x40] sm:$0xff]
    %v30 = vld [vmem:[%s3 + $0x48] sm:$0xff]
    %v31 = vld [vmem:[%s3 + $0x50] sm:$0xff]
    %v32 = vld [vmem:[%s3 + $0x58] sm:$0xff]
    %v33 = vld [vmem:[%s3 + $0x60] sm:$0xff]
    %v34 = vld [vmem:[%s3 + $0x68] sm:$0xff]
    %v35 = vld [vmem:[%s3 + $0x70] sm:$0xff]
    %v36 = vld [vmem:[%s3 + $0x78] sm:$0xff]
    %v37 = vld [vmem:[%s3 + $0x80] sm:$0xff]
    %v38 = vld [vmem:[%s3 + $0x88] sm:$0xff]
    %v39 = vld [vmem:[%s3 + $0x90] sm:$0xff]
    %v40 = vld [vmem:[%s3 + $0x98] sm:$0xff]
    %v41 = vld [vmem:[%s3 + $0xa0] sm:$0xff]
    %v42 = vld [vmem:[%s3 + $0xa8] sm:$0xff]
    %v43 = vld [vmem:[%s3 + $0xb0] sm:$0xff]
    %v44 = vld [vmem:[%s3 + $0xb8] sm:$0xff]
    %v45 = vld [vmem:[%s3 + $0xc0] sm:$0xff]
    %v46 = vld [vmem:[%s3 + $0xc8] sm:$0xff]
    %v47 = vld [vmem:[%s3 + $0xd0] sm:$0xff]
    %v48 = vld [vmem:[%s3 + $0xd8] sm:$0xff]
    %v49 = vld [vmem:[%s3 + $0xe0] sm:$0xff]
    %v50 = vld [vmem:[%s3 + $0xe8] sm:$0xff]
    %v51 = vld [vmem:[%s3 + $0xf0] sm:$0xff]
    %v52 = vld [vmem:[%s3 + $0xf8] sm:$0xff]
    %v53 = vld [vmem:[%s3 + $0x100] sm:$0xff]
    %v54 = vld [vmem:[%s3 + $0x108] sm:$0xff]
    %v55 = vld [vmem:[%s3 + $0x110] sm:$0xff]
    %v56 = vld [vmem:[%s3 + $0x118] sm:$0xff]
    %v57 = vld [vmem:[%s0] sm:$0xff]
    %v58 = vld [vmem:[%s0 + $0x8] sm:$0xff]
    %v59 = vld [vmem:[%s0 + $0x10] sm:$0xff]
    %v60 = vld [vmem:[%s0 + $0x18] sm:$0xff]
    %v61 = vunpack.c.l.bf16 %v57
    %v62 = vunpack.c.h.bf16 %v57
    %v63 = vunpack.c.l.bf16 %v58
    %v64 = vunpack.c.h.bf16 %v58
    %v65 = vunpack.c.l.bf16 %v59
    %v66 = vunpack.c.h.bf16 %v59
    %v67 = vunpack.c.l.bf16 %v60
    %v68 = vunpack.c.h.bf16 %v60
    %69 = vmatprep.subr.mxu0 0.0
    %70 = vmatpush1.msra.mxu0 %v21
    %71 = vmatprep.subr.mxu0 0.0
    %72 = vmatpush1.msra.mxu0 %v22
    %73 = vmatprep.subr.mxu0 0.0
    %74 = vmatpush1.msra.mxu0 %v23
    %75 = vmatprep.subr.mxu0 0.0
    %76 = vmatpush1.msra.mxu0 %v24
    %77 = vmatprep.subr.mxu0 0.0
    %78 = vmatpush1.msra.mxu0 %v25
    %79 = vmatprep.subr.mxu0 0.0
    %80 = vmatpush1.msra.mxu0 %v26
    %81 = vmatprep.subr.mxu0 0.0
    %82 = vmatpush1.msra.mxu0 %v27
    %83 = vmatprep.subr.mxu0 0.0
    %84 = vmatpush1.msra.mxu0 %v28
    %85 = vmatprep.subr.mxu0 0.0
    %86 = vmatpush1.msra.mxu0 %v29
    %87 = vmatprep.subr.mxu0 0.0
    %88 = vmatpush1.msra.mxu0 %v30
    %89 = vmatprep.subr.mxu0 0.0
    %90 = vmatpush1.msra.mxu0 %v31
    %91 = vmatprep.subr.mxu0 0.0
    %92 = vmatpush1.msra.mxu0 %v32
    %93 = vmatprep.subr.mxu0 0.0
    %94 = vmatpush1.msra.mxu0 %v33
    %95 = vmatprep.subr.mxu0 0.0
    %96 = vmatpush1.msra.mxu0 %v34
    %97 = vmatprep.subr.mxu0 0.0
    %98 = vmatpush1.msra.mxu0 %v35
    %99 = vmatprep.subr.mxu0 0.0
    %100 = vmatpush1.msra.mxu0 %v36
    %101 = vmatprep.subr.mxu0 0.0
    %102 = vmatpush1.msra.mxu0 %v37
    %103 = vmatprep.subr.mxu0 0.0
    %104 = vmatpush1.msra.mxu0 %v38
    %105 = vmatprep.subr.mxu0 0.0
    %106 = vmatpush1.msra.mxu0 %v39
    %107 = vmatprep.subr.mxu0 0.0
    %108 = vmatpush1.msra.mxu0 %v40
    %109 = vmatprep.subr.mxu0 0.0
    %110 = vmatpush1.msra.mxu0 %v41
    %111 = vmatprep.subr.mxu0 0.0
    %112 = vmatpush1.msra.mxu0 %v42
    %113 = vmatprep.subr.mxu0 0.0
    %114 = vmatpush1.msra.mxu0 %v43
    %115 = vmatprep.subr.mxu0 0.0
    %116 = vmatpush1.msra.mxu0 %v44
    %117 = vmatprep.subr.mxu0 0.0
    %118 = vmatpush1.msra.mxu0 %v45
    %119 = vmatprep.subr.mxu0 0.0
    %120 = vmatpush1.msra.mxu0 %v46
    %121 = vmatprep.subr.mxu0 0.0
    %122 = vmatpush1.msra.mxu0 %v47
    %123 = vmatprep.subr.mxu0 0.0
    %124 = vmatpush1.msra.mxu0 %v48
    %125 = vmatprep.subr.mxu0 0.0
    %126 = vmatpush1.msra.mxu0 %v49
    %127 = vmatprep.subr.mxu0 0.0
    %128 = vmatpush1.msra.mxu0 %v50
    %129 = vmatprep.subr.mxu0 0.0
    %130 = vmatpush1.msra.mxu0 %v51
    %131 = vmatprep.subr.mxu0 0.0
    %132 = vmatpush1.msra.mxu0 %v52
    %133 = vmatprep.mubr.f32.mxu0 %v62
    %134 = vmatmul.mubr.f32.gmra.mrb[0].mxu0 %v61
    %v135 = vpop.f32.mrb[0].mxu0
    %v136 = vadd.f32 0.0, %v135
    %v137 = vpop.f32.mrb[0].mxu0
    %138 = vmatprep.mubr.f32.mxu0 %v64
    %139 = vmatmul.mubr.f32.gmra.mrb[0].mxu0 %v63
    %v140 = vpop.f32.mrb[0].mxu0
    %v141 = vadd.f32 0.0, %v140
    %v142 = vpop.f32.mrb[0].mxu0
    %143 = vmatprep.mubr.f32.mxu0 %v66
    %144 = vmatmul.mubr.f32.gmra.mrb[0].mxu0 %v65
    %v145 = vpop.f32.mrb[0].mxu0
    %v146 = vadd.f32 0.0, %v145
    %v147 = vpop.f32.mrb[0].mxu0
    %148 = vmatprep.mubr.f32.mxu0 %v68
    %149 = vmatmul.mubr.f32.gmra.mrb[0].mxu0 %v67
    %v150 = vpop.f32.mrb[0].mxu0
    %v151 = vadd.f32 0.0, %v150
    %v152 = vpop.f32.mrb[0].mxu0
    %153 = vdwg.mxu0
    %v154 = vld [vmem:[%s1] sm:$0xff]
    %v155 = vld [vmem:[%s1 + $0x8] sm:$0xff]
    %v156 = vld [vmem:[%s1 + $0x10] sm:$0xff]
    %v157 = vld [vmem:[%s1 + $0x18] sm:$0xff]
    %vm158 = vcmask 15360
    %v159 = vsel %vm158, %v154, 0.0
    %v160 = vsel %vm158, %v155, 0.0
    %v161 = vadd.f32 %v159, %v160
    %v162 = vrot.slane %v161, 4
    %v163 = vadd.f32 %v161, %v162
    %v164 = vrot.slane %v163, 2
    %v165 = vadd.f32 %v163, %v164
    %v166 = vrot.slane %v165, 1
    %v167 = vadd.f32 %v165, %v166
    %v168 = vsel %vm158, %v156, 0.0
    %v169 = vsel %vm158, %v157, 0.0
    %v170 = vadd.f32 %v168, %v169
    %v171 = vrot.slane %v170, 4
    %v172 = vadd.f32 %v170, %v171
    %v173 = vrot.slane %v172, 2
    %v174 = vadd.f32 %v172, %v173
    %v175 = vrot.slane %v174, 1
    %v176 = vadd.f32 %v174, %v175
    %v177 = vrcp.pop 16.0
    %v178 = vmul.f32 %v167, %v177
    %v179 = vmul.f32 %v176, %v177
    %v180 = vsub.f32 %v154, %v178
    %v181 = vsub.f32 %v155, %v178
    %v182 = vsub.f32 %v156, %v179
    %v183 = vsub.f32 %v157, %v179
    %v184 = vmul.f32 %v180, %v180
    %v185 = vmul.f32 %v181, %v181
    %v186 = vmul.f32 %v182, %v182
    %v187 = vmul.f32 %v183, %v183
    %v188 = vsel %vm158, %v184, 0.0
    %v189 = vsel %vm158, %v185, 0.0
    %v190 = vadd.f32 %v188, %v189
    %v191 = vrot.slane %v190, 4
    %v192 = vadd.f32 %v190, %v191
    %v193 = vrot.slane %v192, 2
    %v194 = vadd.f32 %v192, %v193
    %v195 = vrot.slane %v194, 1
    %v196 = vadd.f32 %v194, %v195
    %v197 = vsel %vm158, %v186, 0.0
    %v198 = vsel %vm158, %v187, 0.0
    %v199 = vadd.f32 %v197, %v198
    %v200 = vrot.slane %v199, 4
    %v201 = vadd.f32 %v199, %v200
    %v202 = vrot.slane %v201, 2
    %v203 = vadd.f32 %v201, %v202
    %v204 = vrot.slane %v203, 1
    %v205 = vadd.f32 %v203, %v204
    %v206 = vmul.f32 %v196, %v177
    %v207 = vmul.f32 %v205, %v177
    %v208 = vadd.f32 %v206, 1e-05
    %v209 = vadd.f32 %v207, 1e-05
    %v210 = vrsqrt.pop %v208
    %v211 = vmul.f32 %v208, %v210
    %vm212 = vcmp.eq.f32.partialorder %v208, inf
    %v213 = vsel %vm212, %v208, %v211
    %vm214 = vcmp.eq.f32.partialorder %v208, 0.0
    %v215 = vand.u32 %v208, 2147483648
    %v216 = vsel %vm214, %v215, %v213
    %v217 = vrsqrt.pop %v209
    %v218 = vmul.f32 %v209, %v217
    %vm219 = vcmp.eq.f32.partialorder %v209, inf
    %v220 = vsel %vm219, %v209, %v218
    %vm221 = vcmp.eq.f32.partialorder %v209, 0.0
    %v222 = vand.u32 %v209, 2147483648
    %v223 = vsel %vm221, %v222, %v220
    %v224 = vrcp.pop %v216
    %v225 = vmul.f32 %v180, %v224
    %v226 = vmul.f32 %v181, %v224
    %v227 = vrcp.pop %v223
    %v228 = vmul.f32 %v182, %v227
    %v229 = vmul.f32 %v183, %v227
    %vm234 = vcmask 1046528
    %v235 = vrot.slane %v225, 1
    %v236 = vrot.slane %v226, 1
    %v237 = vsel %vm234, %v235, %v236
    %v238 = vrot.slane %v228, 1
    %v239 = vrot.slane %v229, 1
    %v240 = vsel %vm234, %v238, %v239
    %v247 = vsel %vm234, 0.0, %v235
    %v248 = vsel %vm234, 0.0, %v238
    %v249 = vsel %vm234, %v236, 0.0
    %v250 = vsel %vm234, %v239, 0.0
    %v255 = vrot.slane %v247, 1
    %v256 = vrot.slane %v237, 1
    %v257 = vsel %vm234, %v255, %v256
    %v258 = vrot.slane %v249, 1
    %v259 = vsel %vm234, %v256, %v258
    %v260 = vrot.slane %v248, 1
    %v261 = vrot.slane %v240, 1
    %v262 = vsel %vm234, %v260, %v261
    %v263 = vrot.slane %v250, 1
    %v264 = vsel %vm234, %v261, %v263
    %265 = vrot.lane.b32.xlu0 %v257, 2
    %v266 = vpop.permute.xlu0 %265
    %267 = vrot.lane.b32.xlu0 %v259, 2
    %v268 = vpop.permute.xlu0 %267
    %269 = vrot.lane.b32.xlu0 %v262, 2
    %v270 = vpop.permute.xlu0 %269
    %271 = vrot.lane.b32.xlu0 %v264, 2
    %v272 = vpop.permute.xlu0 %271
    %vm277 = vcmask 1045504
    %v278 = vrot.slane %v247, 2
    %v279 = vrot.slane %v237, 2
    %v280 = vsel %vm277, %v278, %v279
    %v281 = vrot.slane %v249, 2
    %v282 = vsel %vm277, %v279, %v281
    %v283 = vrot.slane %v248, 2
    %v284 = vrot.slane %v240, 2
    %v285 = vsel %vm277, %v283, %v284
    %v286 = vrot.slane %v250, 2
    %v287 = vsel %vm277, %v284, %v286
    %288 = vrot.lane.b32.xlu0 %v280, 4
    %v289 = vpop.permute.xlu0 %288
    %290 = vrot.lane.b32.xlu0 %v282, 4
    %v291 = vpop.permute.xlu0 %290
    %292 = vrot.lane.b32.xlu0 %v285, 4
    %v293 = vpop.permute.xlu0 %292
    %294 = vrot.lane.b32.xlu0 %v287, 4
    %v295 = vpop.permute.xlu0 %294
    %vm300 = vcmask 1044480
    %v301 = vrot.slane %v247, 3
    %v302 = vrot.slane %v237, 3
    %v303 = vsel %vm300, %v301, %v302
    %v304 = vrot.slane %v249, 3
    %v305 = vsel %vm300, %v302, %v304
    %v306 = vrot.slane %v248, 3
    %v307 = vrot.slane %v240, 3
    %v308 = vsel %vm300, %v306, %v307
    %v309 = vrot.slane %v250, 3
    %v310 = vsel %vm300, %v307, %v309
    %311 = vrot.lane.b32.xlu0 %v303, 6
    %v312 = vpop.permute.xlu0 %311
    %313 = vrot.lane.b32.xlu0 %v305, 6
    %v314 = vpop.permute.xlu0 %313
    %315 = vrot.lane.b32.xlu0 %v308, 6
    %v316 = vpop.permute.xlu0 %315
    %317 = vrot.lane.b32.xlu0 %v310, 6
    %v318 = vpop.permute.xlu0 %317
    %vm323 = vcmask 1043456
    %v324 = vrot.slane %v247, 4
    %v325 = vrot.slane %v237, 4
    %v326 = vsel %vm323, %v324, %v325
    %v327 = vrot.slane %v249, 4
    %v328 = vsel %vm323, %v325, %v327
    %v329 = vrot.slane %v248, 4
    %v330 = vrot.slane %v240, 4
    %v331 = vsel %vm323, %v329, %v330
    %v332 = vrot.slane %v250, 4
    %v333 = vsel %vm323, %v330, %v332
    %334 = vrot.lane.b32.xlu0 %v326, 8
    %v335 = vpop.permute.xlu0 %334
    %336 = vrot.lane.b32.xlu0 %v328, 8
    %v337 = vpop.permute.xlu0 %336
    %338 = vrot.lane.b32.xlu0 %v331, 8
    %v339 = vpop.permute.xlu0 %338
    %340 = vrot.lane.b32.xlu0 %v333, 8
    %v341 = vpop.permute.xlu0 %340
    %vm346 = vcmask 1042432
    %v347 = vrot.slane %v247, 5
    %v348 = vrot.slane %v237, 5
    %v349 = vsel %vm346, %v347, %v348
    %v350 = vrot.slane %v249, 5
    %v351 = vsel %vm346, %v348, %v350
    %v352 = vrot.slane %v248, 5
    %v353 = vrot.slane %v240, 5
    %v354 = vsel %vm346, %v352, %v353
    %v355 = vrot.slane %v250, 5
    %v356 = vsel %vm346, %v353, %v355
    %357 = vrot.lane.b32.xlu0 %v349, 10
    %v358 = vpop.permute.xlu0 %357
    %359 = vrot.lane.b32.xlu0 %v351, 10
    %v360 = vpop.permute.xlu0 %359
    %361 = vrot.lane.b32.xlu0 %v354, 10
    %v362 = vpop.permute.xlu0 %361
    %363 = vrot.lane.b32.xlu0 %v356, 10
    %v364 = vpop.permute.xlu0 %363
    %vm369 = vcmask 1041408
    %v370 = vrot.slane %v247, 6
    %v371 = vrot.slane %v237, 6
    %v372 = vsel %vm369, %v370, %v371
    %v373 = vrot.slane %v249, 6
    %v374 = vsel %vm369, %v371, %v373
    %v375 = vrot.slane %v248, 6
    %v376 = vrot.slane %v240, 6
    %v377 = vsel %vm369, %v375, %v376
    %v378 = vrot.slane %v250, 6
    %v379 = vsel %vm369, %v376, %v378
    %380 = vrot.lane.b32.xlu0 %v372, 12
    %v381 = vpop.permute.xlu0 %380
    %382 = vrot.lane.b32.xlu0 %v374, 12
    %v383 = vpop.permute.xlu0 %382
    %384 = vrot.lane.b32.xlu0 %v377, 12
    %v385 = vpop.permute.xlu0 %384
    %386 = vrot.lane.b32.xlu0 %v379, 12
    %v387 = vpop.permute.xlu0 %386
    %vm392 = vcmask 1040384
    %v393 = vrot.slane %v247, 7
    %v394 = vrot.slane %v237, 7
    %v395 = vsel %vm392, %v393, %v394
    %v396 = vrot.slane %v249, 7
    %v397 = vsel %vm392, %v394, %v396
    %v398 = vrot.slane %v248, 7
    %v399 = vrot.slane %v240, 7
    %v400 = vsel %vm392, %v398, %v399
    %v401 = vrot.slane %v250, 7
    %v402 = vsel %vm392, %v399, %v401
    %403 = vrot.lane.b32.xlu0 %v395, 14
    %v404 = vpop.permute.xlu0 %403
    %405 = vrot.lane.b32.xlu0 %v397, 14
    %v406 = vpop.permute.xlu0 %405
    %407 = vrot.lane.b32.xlu0 %v400, 14
    %v408 = vpop.permute.xlu0 %407
    %409 = vrot.lane.b32.xlu0 %v402, 14
    %v410 = vpop.permute.xlu0 %409
    %415 = vrot.lane.b32.xlu0 %v237, 16
    %v416 = vpop.permute.xlu0 %415
    %417 = vrot.lane.b32.xlu0 %v249, 16
    %v418 = vpop.permute.xlu0 %417
    %419 = vrot.lane.b32.xlu0 %v240, 16
    %v420 = vpop.permute.xlu0 %419
    %421 = vrot.lane.b32.xlu0 %v250, 16
    %v422 = vpop.permute.xlu0 %421
    %v428 = vrot.slane 0.0, 1
    %v429 = vsel %vm234, %v258, %v428
    %v430 = vsel %vm234, %v263, %v428
    %431 = vrot.lane.b32.xlu0 %v259, 18
    %v432 = vpop.permute.xlu0 %431
    %433 = vrot.lane.b32.xlu0 %v429, 18
    %v434 = vpop.permute.xlu0 %433
    %435 = vrot.lane.b32.xlu0 %v264, 18
    %v436 = vpop.permute.xlu0 %435
    %437 = vrot.lane.b32.xlu0 %v430, 18
    %v438 = vpop.permute.xlu0 %437
    %v443 = vrot.slane 0.0, 2
    %v444 = vsel %vm277, %v281, %v443
    %v445 = vsel %vm277, %v286, %v443
    %446 = vrot.lane.b32.xlu0 %v282, 20
    %v447 = vpop.permute.xlu0 %446
    %448 = vrot.lane.b32.xlu0 %v444, 20
    %v449 = vpop.permute.xlu0 %448
    %450 = vrot.lane.b32.xlu0 %v287, 20
    %v451 = vpop.permute.xlu0 %450
    %452 = vrot.lane.b32.xlu0 %v445, 20
    %v453 = vpop.permute.xlu0 %452
    %v458 = vrot.slane 0.0, 3
    %v459 = vsel %vm300, %v304, %v458
    %v460 = vsel %vm300, %v309, %v458
    %461 = vrot.lane.b32.xlu0 %v305, 22
    %v462 = vpop.permute.xlu0 %461
    %463 = vrot.lane.b32.xlu0 %v459, 22
    %v464 = vpop.permute.xlu0 %463
    %465 = vrot.lane.b32.xlu0 %v310, 22
    %v466 = vpop.permute.xlu0 %465
    %467 = vrot.lane.b32.xlu0 %v460, 22
    %v468 = vpop.permute.xlu0 %467
    %v473 = vrot.slane 0.0, 4
    %v474 = vsel %vm323, %v327, %v473
    %v475 = vsel %vm323, %v332, %v473
    %476 = vrot.lane.b32.xlu0 %v328, 24
    %v477 = vpop.permute.xlu0 %476
    %478 = vrot.lane.b32.xlu0 %v474, 24
    %v479 = vpop.permute.xlu0 %478
    %480 = vrot.lane.b32.xlu0 %v333, 24
    %v481 = vpop.permute.xlu0 %480
    %482 = vrot.lane.b32.xlu0 %v475, 24
    %v483 = vpop.permute.xlu0 %482
    %v488 = vrot.slane 0.0, 5
    %v489 = vsel %vm346, %v350, %v488
    %v490 = vsel %vm346, %v355, %v488
    %491 = vrot.lane.b32.xlu0 %v351, 26
    %v492 = vpop.permute.xlu0 %491
    %493 = vrot.lane.b32.xlu0 %v489, 26
    %v494 = vpop.permute.xlu0 %493
    %495 = vrot.lane.b32.xlu0 %v356, 26
    %v496 = vpop.permute.xlu0 %495
    %497 = vrot.lane.b32.xlu0 %v490, 26
    %v498 = vpop.permute.xlu0 %497
    %v503 = vrot.slane 0.0, 6
    %v504 = vsel %vm369, %v373, %v503
    %v505 = vsel %vm369, %v378, %v503
    %506 = vrot.lane.b32.xlu0 %v374, 28
    %v507 = vpop.permute.xlu0 %506
    %508 = vrot.lane.b32.xlu0 %v504, 28
    %v509 = vpop.permute.xlu0 %508
    %510 = vrot.lane.b32.xlu0 %v379, 28
    %v511 = vpop.permute.xlu0 %510
    %512 = vrot.lane.b32.xlu0 %v505, 28
    %v513 = vpop.permute.xlu0 %512
    %v518 = vsel %vm158, %v247, %v266
    %v519 = vsel %vm158, %v237, %v268
    %v520 = vsel %vm158, %v248, %v270
    %v521 = vsel %vm158, %v240, %v272
    %vm522 = vcmask 31744
    %v523 = vsel %vm522, %v518, %v289
    %v524 = vsel %vm522, %v519, %v291
    %v525 = vsel %vm522, %v520, %v293
    %v526 = vsel %vm522, %v521, %v295
    %vm527 = vcmask 48128
    %v528 = vsel %vm527, %v523, %v312
    %v529 = vsel %vm527, %v524, %v314
    %v530 = vsel %vm527, %v525, %v316
    %v531 = vsel %vm527, %v526, %v318
    %vm532 = vcmask 64512
    %v533 = vsel %vm532, %v528, %v335
    %v534 = vsel %vm532, %v529, %v337
    %v535 = vsel %vm532, %v530, %v339
    %v536 = vsel %vm532, %v531, %v341
    %vm537 = vcmask 80896
    %v538 = vsel %vm537, %v533, %v358
    %v539 = vsel %vm537, %v534, %v360
    %v540 = vsel %vm537, %v535, %v362
    %v541 = vsel %vm537, %v536, %v364
    %vm542 = vcmask 97280
    %v543 = vsel %vm542, %v538, %v381
    %v544 = vsel %vm542, %v539, %v383
    %v545 = vsel %vm542, %v540, %v385
    %v546 = vsel %vm542, %v541, %v387
    %vm547 = vcmask 113664
    %v548 = vsel %vm547, %v543, %v404
    %v549 = vsel %vm547, %v544, %v406
    %v550 = vsel %vm547, %v545, %v408
    %v551 = vsel %vm547, %v546, %v410
    %vm552 = vcmask 130048
    %v553 = vsel %vm552, %v548, %v416
    %v554 = vsel %vm552, %v549, %v418
    %v555 = vsel %vm552, %v550, %v420
    %v556 = vsel %vm552, %v551, %v422
    %vm557 = vcmask 146432
    %v558 = vsel %vm557, %v553, %v432
    %v559 = vsel %vm557, %v554, %v434
    %v560 = vsel %vm557, %v555, %v436
    %v561 = vsel %vm557, %v556, %v438
    %vm562 = vcmask 162816
    %v563 = vsel %vm562, %v558, %v447
    %v564 = vsel %vm562, %v559, %v449
    %v565 = vsel %vm562, %v560, %v451
    %v566 = vsel %vm562, %v561, %v453
    %vm567 = vcmask 179200
    %v568 = vsel %vm567, %v563, %v462
    %v569 = vsel %vm567, %v564, %v464
    %v570 = vsel %vm567, %v565, %v466
    %v571 = vsel %vm567, %v566, %v468
    %vm572 = vcmask 195584
    %v573 = vsel %vm572, %v568, %v477
    %v574 = vsel %vm572, %v569, %v479
    %v575 = vsel %vm572, %v570, %v481
    %v576 = vsel %vm572, %v571, %v483
    %vm577 = vcmask 211968
    %v578 = vsel %vm577, %v573, %v492
    %v579 = vsel %vm577, %v574, %v494
    %v580 = vsel %vm577, %v575, %v496
    %v581 = vsel %vm577, %v576, %v498
    %vm582 = vcmask 228352
    %v583 = vsel %vm582, %v578, %v507
    %v584 = vsel %vm582, %v579, %v509
    %v585 = vsel %vm582, %v580, %v511
    %v586 = vsel %vm582, %v581, %v513
    %vm587 = vcmask 244736
    %v589 = vsel %vm587, %v583, 0
    %v592 = vsel %vm587, %v584, 0
    %v595 = vsel %vm587, %v585, 0
    %v598 = vsel %vm587, %v586, 0
    %v601 = vsel %vm277, %v56, 0
    %603 = vmatprep.subr.mxu0 0.0
    %604 = vmatpush1.msra.mxu0 %v53
    %605 = vmatprep.subr.mxu0 0.0
    %606 = vmatpush1.msra.mxu0 %v54
    %607 = vmatprep.subr.mxu0 0.0
    %608 = vmatpush1.msra.mxu0 %v55
    %609 = vmatprep.subr.mxu0 0.0
    %610 = vmatpush1.msra.mxu0 %v601
    %611 = vmatprep.subr.mxu0 0.0
    %612 = vmatpush1.msra.mxu0 0.0
    %613 = vmatprep.subr.mxu0 0.0
    %614 = vmatpush1.msra.mxu0 0.0
    %615 = vmatprep.subr.mxu0 0.0
    %616 = vmatpush1.msra.mxu0 0.0
    %617 = vmatprep.subr.mxu0 0.0
    %618 = vmatpush1.msra.mxu0 0.0
    %619 = vmatprep.subr.mxu0 0.0
    %620 = vmatpush1.msra.mxu0 0.0
    %621 = vmatprep.subr.mxu0 0.0
    %622 = vmatpush1.msra.mxu0 0.0
    %623 = vmatprep.subr.mxu0 0.0
    %624 = vmatpush1.msra.mxu0 0.0
    %625 = vmatprep.subr.mxu0 0.0
    %626 = vmatpush1.msra.mxu0 0.0
    %627 = vmatprep.subr.mxu0 0.0
    %628 = vmatpush1.msra.mxu0 0.0
    %629 = vmatprep.subr.mxu0 0.0
    %630 = vmatpush1.msra.mxu0 0.0
    %631 = vmatprep.subr.mxu0 0.0
    %632 = vmatpush1.msra.mxu0 0.0
    %633 = vmatprep.subr.mxu0 0.0
    %634 = vmatpush1.msra.mxu0 0.0
    %635 = vmatprep.subr.mxu0 0.0
    %636 = vmatpush1.msra.mxu0 0.0
    %637 = vmatprep.subr.mxu0 0.0
    %638 = vmatpush1.msra.mxu0 0.0
    %639 = vmatprep.subr.mxu0 0.0
    %640 = vmatpush1.msra.mxu0 0.0
    %641 = vmatprep.subr.mxu0 0.0
    %642 = vmatpush1.msra.mxu0 0.0
    %643 = vmatprep.subr.mxu0 0.0
    %644 = vmatpush1.msra.mxu0 0.0
    %645 = vmatprep.subr.mxu0 0.0
    %646 = vmatpush1.msra.mxu0 0.0
    %647 = vmatprep.subr.mxu0 0.0
    %648 = vmatpush1.msra.mxu0 0.0
    %649 = vmatprep.subr.mxu0 0.0
    %650 = vmatpush1.msra.mxu0 0.0
    %651 = vmatprep.subr.mxu0 0.0
    %652 = vmatpush1.msra.mxu0 0.0
    %653 = vmatprep.subr.mxu0 0.0
    %654 = vmatpush1.msra.mxu0 0.0
    %655 = vmatprep.subr.mxu0 0.0
    %656 = vmatpush1.msra.mxu0 0.0
    %657 = vmatprep.subr.mxu0 0.0
    %658 = vmatpush1.msra.mxu0 0.0
    %659 = vmatprep.subr.mxu0 0.0
    %660 = vmatpush1.msra.mxu0 0.0
    %661 = vmatprep.subr.mxu0 0.0
    %662 = vmatpush1.msra.mxu0 0.0
    %663 = vmatprep.subr.mxu0 0.0
    %664 = vmatpush1.msra.mxu0 0.0
    %665 = vmatprep.subr.mxu0 0.0
    %666 = vmatpush1.msra.mxu0 0.0
    %667 = vmatprep.mubr.f32.mxu0 0.0
    %668 = vmatmul.mubr.f32.gmra.mrb[0].mxu0 %v589
    %v669 = vpop.f32.mrb[0].mxu0
    %v670 = vadd.f32 0.0, %v669
    %v671 = vpop.f32.mrb[0].mxu0
    %672 = vmatprep.mubr.f32.mxu0 0.0
    %673 = vmatmul.mubr.f32.gmra.mrb[0].mxu0 %v592
    %v674 = vpop.f32.mrb[0].mxu0
    %v675 = vadd.f32 0.0, %v674
    %v676 = vpop.f32.mrb[0].mxu0
    %677 = vmatprep.mubr.f32.mxu0 0.0
    %678 = vmatmul.mubr.f32.gmra.mrb[0].mxu0 %v595
    %v679 = vpop.f32.mrb[0].mxu0
    %v680 = vadd.f32 0.0, %v679
    %v681 = vpop.f32.mrb[0].mxu0
    %682 = vmatprep.mubr.f32.mxu0 0.0
    %683 = vmatmul.mubr.f32.gmra.mrb[0].mxu0 %v598
    %v684 = vpop.f32.mrb[0].mxu0
    %v685 = vadd.f32 0.0, %v684
    %v686 = vpop.f32.mrb[0].mxu0
    %687 = vdwg.mxu0
    %v688 = vld [vmem:[%s2] sm:$0x3]
    %v689 = vadd.f32 %v136, %v670
    %v690 = vadd.f32 %v141, %v675
    %v691 = vadd.f32 %v146, %v680
    %v692 = vadd.f32 %v151, %v685
    %v695 = vunpack.c.l.s4 1966171168
    %v696 = vunpack.c.0.s8 %v695
    %v697 = vlaneseq
    %v698 = vshrl.u32 %v697, 7
    %v699 = vsub.s32 %v696, %v698
    %v700 = vrot.slane %v688, %v699
    %v701 = vcombine.high %v700, %v700
    %v703 = vunpack.c.l.s4 1966171168
    %v704 = vunpack.c.0.s8 %v703
    %v705 = vlaneseq
    %v706 = vshrl.u32 %v705, 7
    %v707 = vsub.s32 %v704, %v706
    %v708 = vrot.slane %v700, %v707
    %v710 = vunpack.c.l.s4 1966171168
    %v711 = vunpack.c.0.s8 %v710
    %v712 = vlaneseq
    %v713 = vshrl.u32 %v712, 7
    %v714 = vsub.s32 %v711, %v713
    %v715 = vrot.slane %v701, %v714
    %v716 = vlaneseq
    %v717 = vshrl.u32 %v716, 7
    %v718 = vsub.s32 0, %v717
    %v719 = vrot.slane %v708, %v718
    %v720 = vlaneseq
    %v721 = vshrl.u32 %v720, 7
    %v722 = vsub.s32 0, %v721
    %v723 = vrot.slane %v715, %v722
    %v726 = vadd.f32 %v689, %v719
    %v727 = vadd.f32 %v690, %v719
    %v728 = vadd.f32 %v691, %v723
    %v729 = vadd.f32 %v692, %v723
    %v730 = vlaneseq
    %v731 = vshrl.u32 %v730, 7
    %v732 = vsub.s32 6, %v731
    %v733 = vrot.slane %v56, %v732
    %v734 = vadd.f32 %v726, %v733
    %v735 = vadd.f32 %v727, %v733
    %v736 = vadd.f32 %v728, %v733
    %v737 = vadd.f32 %v729, %v733
    %v738 = vtanh.pop %v734
    %v739 = vtanh.pop %v735
    %v740 = vtanh.pop %v736
    %v741 = vtanh.pop %v737
    %v742 = vlaneseq
    %v743 = vshrl.u32 %v742, 7
    %v744 = vsub.s32 7, %v743
    %v745 = vrot.slane %v56, %v744
    %v746 = vmul.f32 %v738, %v745
    %v747 = vmul.f32 %v739, %v745
    %v748 = vmul.f32 %v740, %v745
    %v749 = vmul.f32 %v741, %v745
    %vm750 = vcmask 261120
    %v751 = vsel %vm750, %v746, 0.0
    %752 = vadd.xlane.f32.xlu0 %v751
    %v753 = vpop.xlane.xlu0 %752
    %v754 = vsel %vm750, %v747, 0.0
    %755 = vadd.xlane.f32.xlu0 %v754
    %v756 = vpop.xlane.xlu0 %755
    %v757 = vsel %vm750, %v748, 0.0
    %758 = vadd.xlane.f32.xlu0 %v757
    %v759 = vpop.xlane.xlu0 %758
    %v760 = vsel %vm750, %v749, 0.0
    %761 = vadd.xlane.f32.xlu0 %v760
    %v762 = vpop.xlane.xlu0 %761
    %v763 = vmax.f32 %v753, %v756
    %v764 = vrot.slane %v763, 4
    %v765 = vmax.f32 %v763, %v764
    %v766 = vrot.slane %v765, 2
    %v767 = vmax.f32 %v765, %v766
    %v768 = vrot.slane %v767, 1
    %v769 = vmax.f32 %v767, %v768
    %v770 = vmax.f32 %v759, %v762
    %v771 = vrot.slane %v770, 4
    %v772 = vmax.f32 %v770, %v771
    %v773 = vrot.slane %v772, 2
    %v774 = vmax.f32 %v772, %v773
    %v775 = vrot.slane %v774, 1
    %v776 = vmax.f32 %v774, %v775
    %v777 = vsub.f32 %v753, %v769
    %v778 = vsub.f32 %v756, %v769
    %v779 = vsub.f32 %v759, %v776
    %v780 = vsub.f32 %v762, %v776
    %v781 = vmul.f32 %v777, 1.442695
    %v782 = vpow.pop %v781
    %v783 = vmul.f32 %v778, 1.442695
    %v784 = vpow.pop %v783
    %v785 = vmul.f32 %v779, 1.442695
    %v786 = vpow.pop %v785
    %v787 = vmul.f32 %v780, 1.442695
    %v788 = vpow.pop %v787
    %v789 = vadd.f32 %v782, %v784
    %v790 = vrot.slane %v789, 4
    %v791 = vadd.f32 %v789, %v790
    %v792 = vrot.slane %v791, 2
    %v793 = vadd.f32 %v791, %v792
    %v794 = vrot.slane %v793, 1
    %v795 = vadd.f32 %v793, %v794
    %v796 = vadd.f32 %v786, %v788
    %v797 = vrot.slane %v796, 4
    %v798 = vadd.f32 %v796, %v797
    %v799 = vrot.slane %v798, 2
    %v800 = vadd.f32 %v798, %v799
    %v801 = vrot.slane %v800, 1
    %v802 = vadd.f32 %v800, %v801
    %v803 = vrcp.pop %v795
    %v804 = vmul.f32 %v782, %v803
    %v805 = vmul.f32 %v784, %v803
    %v806 = vrcp.pop %v802
    %v807 = vmul.f32 %v786, %v806
    %v808 = vmul.f32 %v788, %v806
    %809 = vxpose.xlu0.b32.start [1/16] %v804, 128
    %810 = vxpose.xlu0.b32.cont [2/16] %v805, 128
    %811 = vxpose.xlu0.b32.cont [3/16] 0.0, 128
    %812 = vxpose.xlu0.b32.cont [4/16] 0.0, 128
    %813 = vxpose.xlu0.b32.cont [5/16] 0.0, 128
    %814 = vxpose.xlu0.b32.cont [6/16] 0.0, 128
    %815 = vxpose.xlu0.b32.cont [7/16] 0.0, 128
    %816 = vxpose.xlu0.b32.cont [8/16] 0.0, 128
    %817 = vxpose.xlu0.b32.cont [9/16] 0.0, 128
    %818 = vxpose.xlu0.b32.cont [10/16] 0.0, 128
    %819 = vxpose.xlu0.b32.cont [11/16] 0.0, 128
    %820 = vxpose.xlu0.b32.cont [12/16] 0.0, 128
    %821 = vxpose.xlu0.b32.cont [13/16] 0.0, 128
    %822 = vxpose.xlu0.b32.cont [14/16] 0.0, 128
    %823 = vxpose.xlu0.b32.cont [15/16] 0.0, 128
    %824 = vxpose.xlu0.b32.end [16/16] 0.0, 128
    %v825 = vpop.trf.xlu0
    %v826 = vpop.trf.xlu0
    %v827 = vpop.trf.xlu0
    %v828 = vpop.trf.xlu0
    %v829 = vpop.trf.xlu0
    %v830 = vpop.trf.xlu0
    %v831 = vpop.trf.xlu0
    %v832 = vpop.trf.xlu0
    %v833 = vpop.trf.xlu0
    %v834 = vpop.trf.xlu0
    %v835 = vpop.trf.xlu0
    %v836 = vpop.trf.xlu0
    %v837 = vpop.trf.xlu0
    %v838 = vpop.trf.xlu0
    %v839 = vpop.trf.xlu0
    %v840 = vpop.trf.xlu0
    %841 = vxpose.xlu0.b32.start [1/16] %v807, 128
    %842 = vxpose.xlu0.b32.cont [2/16] %v808, 128
    %843 = vxpose.xlu0.b32.cont [3/16] 0.0, 128
    %844 = vxpose.xlu0.b32.cont [4/16] 0.0, 128
    %845 = vxpose.xlu0.b32.cont [5/16] 0.0, 128
    %846 = vxpose.xlu0.b32.cont [6/16] 0.0, 128
    %847 = vxpose.xlu0.b32.cont [7/16] 0.0, 128
    %848 = vxpose.xlu0.b32.cont [8/16] 0.0, 128
    %849 = vxpose.xlu0.b32.cont [9/16] 0.0, 128
    %850 = vxpose.xlu0.b32.cont [10/16] 0.0, 128
    %851 = vxpose.xlu0.b32.cont [11/16] 0.0, 128
    %852 = vxpose.xlu0.b32.cont [12/16] 0.0, 128
    %853 = vxpose.xlu0.b32.cont [13/16] 0.0, 128
    %854 = vxpose.xlu0.b32.cont [14/16] 0.0, 128
    %855 = vxpose.xlu0.b32.cont [15/16] 0.0, 128
    %856 = vxpose.xlu0.b32.end [16/16] 0.0, 128
    %v857 = vpop.trf.xlu0
    %v858 = vpop.trf.xlu0
    %v859 = vpop.trf.xlu0
    %v860 = vpop.trf.xlu0
    %v861 = vpop.trf.xlu0
    %v862 = vpop.trf.xlu0
    %v863 = vpop.trf.xlu0
    %v864 = vpop.trf.xlu0
    %v865 = vpop.trf.xlu0
    %v866 = vpop.trf.xlu0
    %v867 = vpop.trf.xlu0
    %v868 = vpop.trf.xlu0
    %v869 = vpop.trf.xlu0
    %v870 = vpop.trf.xlu0
    %v871 = vpop.trf.xlu0
    %v872 = vpop.trf.xlu0
    %v875 = vrot.slane %v857, 7
    %vm876 = vcmask 1041409
    %v877 = vsel %vm876, %v875, %v825
    %vm879 = vcmask 123904
    %880 = vst.msk [vmem:[#allocation4] sm:$0x3] %vm879, %v877
    %v881 = vsel %vm552, %v825, 0
    %883 = vmatprep.subr.mxu0 %v62
    %884 = vmatpush1.msra.mxu0 %v61
    %885 = vmatprep.subr.mxu0 %v64
    %886 = vmatpush1.msra.mxu0 %v63
    %887 = vmatprep.subr.mxu0 0.0
    %888 = vmatpush1.msra.mxu0 0.0
    %889 = vmatprep.subr.mxu0 0.0
    %890 = vmatpush1.msra.mxu0 0.0
    %891 = vmatprep.subr.mxu0 0.0
    %892 = vmatpush1.msra.mxu0 0.0
    %893 = vmatprep.subr.mxu0 0.0
    %894 = vmatpush1.msra.mxu0 0.0
    %895 = vmatprep.subr.mxu0 0.0
    %896 = vmatpush1.msra.mxu0 0.0
    %897 = vmatprep.subr.mxu0 0.0
    %898 = vmatpush1.msra.mxu0 0.0
    %899 = vmatprep.subr.mxu0 0.0
    %900 = vmatpush1.msra.mxu0 0.0
    %901 = vmatprep.subr.mxu0 0.0
    %902 = vmatpush1.msra.mxu0 0.0
    %903 = vmatprep.subr.mxu0 0.0
    %904 = vmatpush1.msra.mxu0 0.0
    %905 = vmatprep.subr.mxu0 0.0
    %906 = vmatpush1.msra.mxu0 0.0
    %907 = vmatprep.subr.mxu0 0.0
    %908 = vmatpush1.msra.mxu0 0.0
    %909 = vmatprep.subr.mxu0 0.0
    %910 = vmatpush1.msra.mxu0 0.0
    %911 = vmatprep.subr.mxu0 0.0
    %912 = vmatpush1.msra.mxu0 0.0
    %913 = vmatprep.subr.mxu0 0.0
    %914 = vmatpush1.msra.mxu0 0.0
    %915 = vmatprep.subr.mxu0 0.0
    %916 = vmatpush1.msra.mxu0 0.0
    %917 = vmatprep.subr.mxu0 0.0
    %918 = vmatpush1.msra.mxu0 0.0
    %919 = vmatprep.subr.mxu0 0.0
    %920 = vmatpush1.msra.mxu0 0.0
    %921 = vmatprep.subr.mxu0 0.0
    %922 = vmatpush1.msra.mxu0 0.0
    %923 = vmatprep.subr.mxu0 0.0
    %924 = vmatpush1.msra.mxu0 0.0
    %925 = vmatprep.subr.mxu0 0.0
    %926 = vmatpush1.msra.mxu0 0.0
    %927 = vmatprep.subr.mxu0 0.0
    %928 = vmatpush1.msra.mxu0 0.0
    %929 = vmatprep.subr.mxu0 0.0
    %930 = vmatpush1.msra.mxu0 0.0
    %931 = vmatprep.subr.mxu0 0.0
    %932 = vmatpush1.msra.mxu0 0.0
    %933 = vmatprep.subr.mxu0 0.0
    %934 = vmatpush1.msra.mxu0 0.0
    %935 = vmatprep.subr.mxu0 0.0
    %936 = vmatpush1.msra.mxu0 0.0
    %937 = vmatprep.subr.mxu0 0.0
    %938 = vmatpush1.msra.mxu0 0.0
    %939 = vmatprep.subr.mxu0 0.0
    %940 = vmatpush1.msra.mxu0 0.0
    %941 = vmatprep.subr.mxu0 0.0
    %942 = vmatpush1.msra.mxu0 0.0
    %943 = vmatprep.subr.mxu0 0.0
    %944 = vmatpush1.msra.mxu0 0.0
    %945 = vmatprep.subr.mxu0 0.0
    %946 = vmatpush1.msra.mxu0 0.0
    %947 = vmatprep.mubr.f32.mxu0 0.0
    %948 = vmatmul.mubr.f32.gmra.mrb[0].mxu0 %v881
    %v949 = vpop.f32.mrb[0].mxu0
    %v950 = vadd.f32 0.0, %v949
    %v951 = vpop.f32.mrb[0].mxu0
    %v952 = vadd.f32 0.0, %v951
    %953 = vdwg.mxu0
    %v954 = vsel %vm552, %v857, 0
    %956 = vmatprep.subr.mxu0 %v66
    %957 = vmatpush1.msra.mxu0 %v65
    %958 = vmatprep.subr.mxu0 %v68
    %959 = vmatpush1.msra.mxu0 %v67
    %960 = vmatprep.subr.mxu0 0.0
    %961 = vmatpush1.msra.mxu0 0.0
    %962 = vmatprep.subr.mxu0 0.0
    %963 = vmatpush1.msra.mxu0 0.0
    %964 = vmatprep.subr.mxu0 0.0
    %965 = vmatpush1.msra.mxu0 0.0
    %966 = vmatprep.subr.mxu0 0.0
    %967 = vmatpush1.msra.mxu0 0.0
    %968 = vmatprep.subr.mxu0 0.0
    %969 = vmatpush1.msra.mxu0 0.0
    %970 = vmatprep.subr.mxu0 0.0
    %971 = vmatpush1.msra.mxu0 0.0
    %972 = vmatprep.subr.mxu0 0.0
    %973 = vmatpush1.msra.mxu0 0.0
    %974 = vmatprep.subr.mxu0 0.0
    %975 = vmatpush1.msra.mxu0 0.0
    %976 = vmatprep.subr.mxu0 0.0
    %977 = vmatpush1.msra.mxu0 0.0
    %978 = vmatprep.subr.mxu0 0.0
    %979 = vmatpush1.msra.mxu0 0.0
    %980 = vmatprep.subr.mxu0 0.0
    %981 = vmatpush1.msra.mxu0 0.0
    %982 = vmatprep.subr.mxu0 0.0
    %983 = vmatpush1.msra.mxu0 0.0
    %984 = vmatprep.subr.mxu0 0.0
    %985 = vmatpush1.msra.mxu0 0.0
    %986 = vmatprep.subr.mxu0 0.0
    %987 = vmatpush1.msra.mxu0 0.0
    %988 = vmatprep.subr.mxu0 0.0
    %989 = vmatpush1.msra.mxu0 0.0
    %990 = vmatprep.subr.mxu0 0.0
    %991 = vmatpush1.msra.mxu0 0.0
    %992 = vmatprep.subr.mxu0 0.0
    %993 = vmatpush1.msra.mxu0 0.0
    %994 = vmatprep.subr.mxu0 0.0
    %995 = vmatpush1.msra.mxu0 0.0
    %996 = vmatprep.subr.mxu0 0.0
    %997 = vmatpush1.msra.mxu0 0.0
    %998 = vmatprep.subr.mxu0 0.0
    %999 = vmatpush1.msra.mxu0 0.0
    %1000 = vmatprep.subr.mxu0 0.0
    %1001 = vmatpush1.msra.mxu0 0.0
    %1002 = vmatprep.subr.mxu0 0.0
    %1003 = vmatpush1.msra.mxu0 0.0
    %1004 = vmatprep.subr.mxu0 0.0
    %1005 = vmatpush1.msra.mxu0 0.0
    %1006 = vmatprep.subr.mxu0 0.0
    %1007 = vmatpush1.msra.mxu0 0.0
    %1008 = vmatprep.subr.mxu0 0.0
    %1009 = vmatpush1.msra.mxu0 0.0
    %1010 = vmatprep.subr.mxu0 0.0
    %1011 = vmatpush1.msra.mxu0 0.0
    %1012 = vmatprep.subr.mxu0 0.0
    %1013 = vmatpush1.msra.mxu0 0.0
    %1014 = vmatprep.subr.mxu0 0.0
    %1015 = vmatpush1.msra.mxu0 0.0
    %1016 = vmatprep.subr.mxu0 0.0
    %1017 = vmatpush1.msra.mxu0 0.0
    %1018 = vmatprep.subr.mxu0 0.0
    %1019 = vmatpush1.msra.mxu0 0.0
    %1020 = vmatprep.mubr.f32.mxu0 0.0
    %1021 = vmatmul.mubr.f32.gmra.mrb[0].mxu0 %v954
    %v1022 = vpop.f32.mrb[0].mxu0
    %v1023 = vadd.f32 0.0, %v1022
    %v1024 = vpop.f32.mrb[0].mxu0
    %v1025 = vadd.f32 0.0, %v1024
    %1026 = vdwg.mxu0
    %v1031 = vcombine.low %v950, %v952
    %v1033 = vunpack.c.l.s4 1983009808
    %v1034 = vunpack.c.0.s8 %v1033
    %v1035 = vlaneseq
    %v1036 = vshrl.u32 %v1035, 7
    %v1037 = vsub.s32 %v1034, %v1036
    %v1038 = vrot.slane %v1031, %v1037
    %v1039 = vcombine.low %v1023, %v1025
    %v1041 = vunpack.c.l.s4 1983009808
    %v1042 = vunpack.c.0.s8 %v1041
    %v1043 = vlaneseq
    %v1044 = vshrl.u32 %v1043, 7
    %v1045 = vsub.s32 %v1042, %v1044
    %v1046 = vrot.slane %v1039, %v1045
    %vm1047 = vcmask 1044484
    %v1048 = vsel %vm1047, %v1038, %v1038
    %vm1049 = vcmask 1046534
    %v1050 = vsel %vm1049, %v1038, %v1048
    %v1051 = vrot.slane %v1046, 7
    %v1052 = vsel %vm876, %v1051, %v1050
    %vm1053 = vcmask 1043459
    %v1054 = vsel %vm1053, %v1051, %v1052
    %vm1055 = vcmask 1045509
    %v1056 = vsel %vm1055, %v1051, %v1054
    %vm1057 = vcmask 1047559
    %v1058 = vsel %vm1057, %v1051, %v1056
    %1060 = vst [vmem:[#allocation2] sm:$0xf] %v1058
    // Predicated region
    $region18: #{tpu_custom_call.1} parent=1 // pred_check
      _
    $region19: #{tpu_custom_call.1} parent=1 // pred_check_branch
      %1062 = sbr.rel (0) target = $region21
    $region20: #{tpu_custom_call.1} parent=1 // pred_region
      %s1064 = ssub.s32 64, 64
      %1065 = vsyncadd [#allocation3], %s1064
      %s1067 = sshll.u32 [#allocation2], 4
      %s1068 = int_to_ptr.vmem [resolvable:$true] %s1067
      %1070 = dma.vmem_to_hbm [thread:$0]  %s1068, 64, %s4, [#allocation3]
    $region21: #{tpu_custom_call.1} parent=1 // pred_fallthru
      _
    // Predicated region
    $region22: #{tpu_custom_call.1} parent=1 // pred_check
      _
    $region23: #{tpu_custom_call.1} parent=1 // pred_check_branch
      %1072 = sbr.rel (0) target = $region25
    $region24: #{tpu_custom_call.1} parent=1 // pred_region
      %s1074 = ssub.s32 32, 32
      %1075 = vsyncadd [#allocation5], %s1074
      %s1077 = sshll.u32 [#allocation4], 4
      %s1078 = int_to_ptr.vmem [resolvable:$true] %s1077
      %1080 = dma.vmem_to_hbm [thread:$0]  %s1078, 32, %s5, [#allocation5]
    $region25: #{tpu_custom_call.1} parent=1 // pred_fallthru
      _
    // Predicated region
    $region26: #{tpu_custom_call.1} parent=1 // pred_check
      _
    $region27: #{tpu_custom_call.1} parent=1 // pred_check_branch
      %1082 = sbr.rel (0) target = $region29
    $region28: #{tpu_custom_call.1} parent=1 // pred_region
      %1083 = dma.done [#allocation3], 64
    $region29: #{tpu_custom_call.1} parent=1 // pred_fallthru
      _
    // Predicated region
    $region30: #{tpu_custom_call.1} parent=1 // pred_check
      _
    $region31: #{tpu_custom_call.1} parent=1 // pred_check_branch
      %1085 = sbr.rel (0) target = $region33
    $region32: #{tpu_custom_call.1} parent=1 // pred_region
      %1086 = dma.done [#allocation5], 32
    $region33: #{tpu_custom_call.1} parent=1 // pred_fallthru
      _
    %1087 = vsyncpa [#allocation3], 1
    %1088 = vsyncpa [#allocation5], 1

</llo_original>
